<compile_context>
chip_gen: v5e
topology: v5e:2x2
jax: 0.10.0
libtpu: 0.0.40
codegen_flags: <defaults>
</compile_context>

<pallas_src>
import functools

import jax
import jax.numpy as jnp
from jax.experimental import pallas as pl
from jax.experimental.pallas import tpu as pltpu


def cnn_lstm_kernel(xcol_ref, p_ref, out_ref, *, T, Bp, H_lstm, LANES, KDp,
                    off_cw, off_cb, off_wih, off_b, off_whh, off_ps, off_po,
                    off_fcw, off_fcb):
    """Fused Conv1d(+ReLU) -> LSTM -> Linear.

    xcol_ref : (T*Bp, KDp)    im2col'd input, time-major rows (row = t*Bp + b),
                              lane-padded with zeros to KDp.
    p_ref    : (rows, 128)    packed parameter slab (8-row-aligned sections):
                              conv weight / conv bias / W_ih (pre-scaled, zero-padded to
                              128 rows) / b_ih+b_hh (pre-scaled) / W_hh (pre-scaled) /
                              post_scale / post_off / FC weight / FC bias.
    out_ref  : (Bp, 128)      lane-padded output (full-tile unmasked store).
    """
    # --- Conv1d ("same" padding) + ReLU: one matmul over all (t, b) rows.
    # Output is 128 lanes wide; lanes >= H_conv are exactly zero (zero weight columns,
    # zero bias) so the 128-row, zero-padded W_ih below reproduces the 32-wide result.
    conv = jnp.dot(xcol_ref[...], p_ref[off_cw:off_cw + KDp, :],
                   preferred_element_type=jnp.float32)
    conv = jnp.maximum(conv + p_ref[off_cb:off_cb + 1, :], 0.0)       # (T*Bp, 128)

    # --- Input projection hoisted out of the recurrence (lane-dense, 4H = 128 lanes).
    # W_ih and b are pre-scaled by 0.5 on the i/f/o lanes (single-tanh activation).
    xw = jnp.dot(conv, p_ref[off_wih:off_wih + LANES, :],
                 preferred_element_type=jnp.float32) + p_ref[off_b:off_b + 1, :]

    whh = p_ref[off_whh:off_whh + H_lstm, :]                          # (H, 4H) pre-scaled
    post_scale = p_ref[off_ps:off_ps + 1, :]                          # (1, 128)
    post_off = p_ref[off_po:off_po + 1, :]                            # (1, 128)

    h = jnp.zeros((Bp, H_lstm), jnp.float32)
    c = jnp.zeros((Bp, H_lstm), jnp.float32)

    # T is static & small -> fully unrolled; h/c are loop-carried vreg values.
    # Each step: one (Bp, H)@(H, 4H) MXU push + ONE full-vreg tanh + gate VPU math.
    for t in range(T):
        gates = xw[t * Bp:(t + 1) * Bp, :] + jnp.dot(
            h, whh, preferred_element_type=jnp.float32)               # (Bp, 4H), pre-scaled
        act = post_scale * jnp.tanh(gates) + post_off                 # sigmoid/tanh per lane
        i = act[:, 0 * H_lstm:1 * H_lstm]
        f = act[:, 1 * H_lstm:2 * H_lstm]
        g = act[:, 2 * H_lstm:3 * H_lstm]
        o = act[:, 3 * H_lstm:4 * H_lstm]
        c = f * c + i * g
        h = o * jnp.tanh(c)

    # --- Final Linear on the last hidden state (lane-padded, unmasked full-tile store).
    out_ref[...] = (jnp.dot(h, p_ref[off_fcw:off_fcw + H_lstm, :],
                            preferred_element_type=jnp.float32)
                    + p_ref[off_fcb:off_fcb + 1, :])


def prepare_kernel_params(params, kernel_size, input_dim):
    """One-time (init) packing of all parameters into a single lane-dense slab.

    Also bakes in: b_ih + b_hh fold (done in make_params), conv/FC lane padding, the
    0.5 activation pre-scale on the i/f/o gate lanes, and the post-scale/offset rows.
    """
    K, D_in = kernel_size, input_dim
    H_conv = params["conv_w"].shape[2]
    H_lstm = params["w_hh"].shape[0]
    D_out = params["fc_w"].shape[1]
    LANES = 128
    assert 4 * H_lstm == LANES, "design assumes 4*lstm_hidden_dim == 128 lanes"
    assert H_conv <= LANES and D_out <= LANES and K * D_in <= LANES

    def r8(n):
        return ((n + 7) // 8) * 8

    KD = K * D_in
    KDp = r8(KD)
    off_cw = 0
    off_cb = off_cw + r8(KDp)
    off_wih = off_cb + 8
    off_b = off_wih + LANES
    off_whh = off_b + 8
    off_ps = off_whh + r8(H_lstm)
    off_po = off_ps + 8
    off_fcw = off_po + 8
    off_fcb = off_fcw + r8(H_lstm)
    rows = r8(off_fcb + 8)

    # Single-tanh activation: sigmoid(x) = 0.5*tanh(0.5*x) + 0.5 on i/f/o lanes,
    # tanh(x) on the g lanes ([2H, 3H)).  Pre-scale folded into W_ih, b, W_hh.
    lane = jnp.arange(LANES)
    g_lane = (lane >= 2 * H_lstm) & (lane < 3 * H_lstm)
    pre_scale = jnp.where(g_lane, 1.0, 0.5).astype(jnp.float32)
    post_scale = jnp.where(g_lane, 1.0, 0.5).astype(jnp.float32)
    post_off = jnp.where(g_lane, 0.0, 0.5).astype(jnp.float32)

    slab = jnp.zeros((rows, LANES), jnp.float32)
    cw_col = params["conv_w"].reshape(KD, H_conv)                     # row = k*D_in + d
    slab = slab.at[off_cw:off_cw + KD, :H_conv].set(cw_col)
    slab = slab.at[off_cb, :H_conv].set(params["conv_b"][0])
    slab = slab.at[off_wih:off_wih + H_conv, :].set(params["w_ih"] * pre_scale[None, :])
    slab = slab.at[off_b, :].set(params["b"][0] * pre_scale)
    slab = slab.at[off_whh:off_whh + H_lstm, :].set(params["w_hh"] * pre_scale[None, :])
    slab = slab.at[off_ps, :].set(post_scale)
    slab = slab.at[off_po, :].set(post_off)
    slab = slab.at[off_fcw:off_fcw + H_lstm, :D_out].set(params["fc_w"])
    slab = slab.at[off_fcb, :D_out].set(params["fc_b"][0])

    cfg = dict(K=K, KD=KD, KDp=KDp, H_lstm=H_lstm, D_out=D_out, LANES=LANES,
               off_cw=off_cw, off_cb=off_cb, off_wih=off_wih, off_b=off_b,
               off_whh=off_whh, off_ps=off_ps, off_po=off_po,
               off_fcw=off_fcw, off_fcb=off_fcb)
    return slab, cfg


def cnn_lstm_forward(x, slab, cfg):
    B, T, D_in = x.shape
    K = cfg["K"]
    assert K % 2 == 1, "PyTorch padding=K//2 'same' semantics assumed (odd K)"
    pad = K // 2
    Bp = 8                                    # sublane-full batch padding
    assert B <= Bp

    # --- Per-call layout plumbing only (no arithmetic): B-pad, im2col with time-major
    # rows (row = t*Bp + b), lane-pad to KDp.
    xb = jnp.zeros((Bp, T, D_in), jnp.float32).at[:B].set(x)
    x_pad = jnp.pad(xb, ((0, 0), (pad, pad), (0, 0)))                  # (Bp, T+K-1, D)
    cols = jnp.stack([x_pad[:, k:k + T, :] for k in range(K)], axis=2)  # (Bp, T, K, D)
    x_col = cols.transpose(1, 0, 2, 3).reshape(T * Bp, cfg["KD"])
    x_col = jnp.pad(x_col, ((0, 0), (0, cfg["KDp"] - cfg["KD"])))

    kern = functools.partial(
        cnn_lstm_kernel, T=T, Bp=Bp, H_lstm=cfg["H_lstm"], LANES=cfg["LANES"],
        KDp=cfg["KDp"], off_cw=cfg["off_cw"], off_cb=cfg["off_cb"],
        off_wih=cfg["off_wih"], off_b=cfg["off_b"], off_whh=cfg["off_whh"],
        off_ps=cfg["off_ps"], off_po=cfg["off_po"], off_fcw=cfg["off_fcw"],
        off_fcb=cfg["off_fcb"])

    vmem = functools.partial(pl.BlockSpec, memory_space=pltpu.MemorySpace.VMEM)
    out_pad = pl.pallas_call(
        kern,
        out_shape=jax.ShapeDtypeStruct((Bp, cfg["LANES"]), jnp.float32),
        in_specs=[vmem(), vmem()],
        out_specs=vmem(),
    )(x_col, slab)
    return out_pad[:B, :cfg["D_out"]]


def make_params(key, input_dim, hidden_dim, kernel_size, lstm_hidden_dim, output_dim):
    ks = jax.random.split(key, 8)
    s = 0.1
    # Conv1d weight (H, D, K) in PyTorch -> stored tap-major (K, D, H).
    conv_w = s * jax.random.normal(ks[0], (kernel_size, input_dim, hidden_dim), jnp.float32)
    conv_b = s * jax.random.normal(ks[1], (1, hidden_dim), jnp.float32)
    # LSTM weights: PyTorch (4H, in) -> stored transposed (in, 4H); gate order i,f,g,o.
    w_ih = s * jax.random.normal(ks[2], (hidden_dim, 4 * lstm_hidden_dim), jnp.float32)
    w_hh = s * jax.random.normal(ks[3], (lstm_hidden_dim, 4 * lstm_hidden_dim), jnp.float32)
    b_ih = s * jax.random.normal(ks[4], (1, 4 * lstm_hidden_dim), jnp.float32)
    b_hh = s * jax.random.normal(ks[5], (1, 4 * lstm_hidden_dim), jnp.float32)
    fc_w = s * jax.random.normal(ks[6], (lstm_hidden_dim, output_dim), jnp.float32)
    fc_b = s * jax.random.normal(ks[7], (1, output_dim), jnp.float32)
    return dict(conv_w=conv_w, conv_b=conv_b, w_ih=w_ih, w_hh=w_hh,
                b=b_ih + b_hh, fc_w=fc_w, fc_b=fc_b)


def reference_forward(x, params, kernel_size):
    """Pure-JAX reference mirroring PyTorch semantics exactly."""
    K = kernel_size
    pad = K // 2
    x_pad = jnp.pad(x, ((0, 0), (pad, pad), (0, 0)))
    T_out = x_pad.shape[1] - (K - 1)
    conv = jnp.zeros((x.shape[0], T_out, params["conv_w"].shape[2]), jnp.float32)
    for k in range(K):
        conv = conv + jnp.einsum("btd,dh->bth", x_pad[:, k:k + T_out, :], params["conv_w"][k])
    conv = jax.nn.relu(conv + params["conv_b"][0])
    Hl = params["w_hh"].shape[0]
    B = x.shape[0]
    h = jnp.zeros((B, Hl), jnp.float32)
    c = jnp.zeros((B, Hl), jnp.float32)
    for t in range(T_out):
        g = conv[:, t, :] @ params["w_ih"] + h @ params["w_hh"] + params["b"][0]
        i = jax.nn.sigmoid(g[:, :Hl])
        f = jax.nn.sigmoid(g[:, Hl:2 * Hl])
        gg = jnp.tanh(g[:, 2 * Hl:3 * Hl])
        o = jax.nn.sigmoid(g[:, 3 * Hl:])
        c = f * c + i * gg
        h = o * jnp.tanh(c)
    return h @ params["fc_w"] + params["fc_b"][0]


if __name__ == "__main__":
    # Small shapes consistent with the module: batch=2, seq=8, input_dim=4,
    # conv hidden_dim=32, kernel_size=3, lstm_hidden_dim=32, output_dim=8.
    B, T, D_IN = 2, 8, 4
    H_CONV, K, H_LSTM, D_OUT = 32, 3, 32, 8

    key = jax.random.PRNGKey(0)
    kx, kp = jax.random.split(key)
    x = jax.random.normal(kx, (B, T, D_IN), jnp.float32)
    params = make_params(kp, D_IN, H_CONV, K, H_LSTM, D_OUT)

    # One-time parameter packing (hoisted out of the per-call path).
    slab, cfg = prepare_kernel_params(params, K, D_IN)
    slab = jax.block_until_ready(slab)

    fwd = jax.jit(functools.partial(cnn_lstm_forward, cfg=cfg))
    out = jax.block_until_ready(fwd(x, slab))

    ref = jax.block_until_ready(reference_forward(x, params, K))
    assert out.shape == (B, D_OUT)
    assert jnp.allclose(out, ref, rtol=1e-4, atol=1e-4), "mismatch vs pure-JAX reference"

    print("KERNEL_OK")
</pallas_src>

<mosaic_0001>
module attributes {stable_mosaic.version = 11 : i64} {
  func.func @cnn_lstm_kernel(%arg0: memref<64x16xf32, #tpu.memory_space<vmem>>, %arg1: memref<248x128xf32, #tpu.memory_space<vmem>>, %arg2: memref<8x128xf32, #tpu.memory_space<vmem>>) attributes {dimension_semantics = [], scalar_prefetch = 0 : i64, scratch_operands = 0 : i64, tpu.core_type = #tpu.core_type<tc>} {
    %c0 = arith.constant 0 : index
    %c0_0 = arith.constant 0 : index
    %0 = vector.load %arg0[%c0, %c0_0] : memref<64x16xf32, #tpu.memory_space<vmem>>, vector<64x16xf32>
    %c0_1 = arith.constant 0 : index
    %c0_2 = arith.constant 0 : index
    %1 = vector.load %arg1[%c0_1, %c0_2] : memref<248x128xf32, #tpu.memory_space<vmem>>, vector<16x128xf32>
    %cst = arith.constant dense<0.000000e+00> : vector<64x128xf32>
    %2 = tpu.matmul %0, %1, %cst {dimension_numbers = #tpu.dot_dimension_numbers<[1], [0], [0], [1], [0, 0, 1, 1], [], []>} : vector<64x16xf32>, vector<16x128xf32>, vector<64x128xf32> -> vector<64x128xf32>
    %c16 = arith.constant 16 : index
    %c0_3 = arith.constant 0 : index
    %3 = vector.load %arg1[%c16, %c0_3] : memref<248x128xf32, #tpu.memory_space<vmem>>, vector<1x128xf32>
    %4 = vector.broadcast %3 : vector<1x128xf32> to vector<64x128xf32>
    %5 = arith.addf %2, %4 : vector<64x128xf32>
    %cst_4 = arith.constant 0.000000e+00 : f32
    %6 = vector.broadcast %cst_4 : f32 to vector<64x128xf32>
    %7 = arith.maximumf %5, %6 : vector<64x128xf32>
    %c24 = arith.constant 24 : index
    %c0_5 = arith.constant 0 : index
    %8 = vector.load %arg1[%c24, %c0_5] : memref<248x128xf32, #tpu.memory_space<vmem>>, vector<128x128xf32>
    %cst_6 = arith.constant dense<0.000000e+00> : vector<64x128xf32>
    %9 = tpu.matmul %7, %8, %cst_6 {dimension_numbers = #tpu.dot_dimension_numbers<[1], [0], [0], [1], [0, 0, 1, 1], [], []>} : vector<64x128xf32>, vector<128x128xf32>, vector<64x128xf32> -> vector<64x128xf32>
    %c152 = arith.constant 152 : index
    %c0_7 = arith.constant 0 : index
    %10 = vector.load %arg1[%c152, %c0_7] : memref<248x128xf32, #tpu.memory_space<vmem>>, vector<1x128xf32>
    %11 = vector.broadcast %10 : vector<1x128xf32> to vector<64x128xf32>
    %12 = arith.addf %9, %11 : vector<64x128xf32>
    %c160 = arith.constant 160 : index
    %c0_8 = arith.constant 0 : index
    %13 = vector.load %arg1[%c160, %c0_8] : memref<248x128xf32, #tpu.memory_space<vmem>>, vector<32x128xf32>
    %c192 = arith.constant 192 : index
    %c0_9 = arith.constant 0 : index
    %14 = vector.load %arg1[%c192, %c0_9] : memref<248x128xf32, #tpu.memory_space<vmem>>, vector<1x128xf32>
    %c200 = arith.constant 200 : index
    %c0_10 = arith.constant 0 : index
    %15 = vector.load %arg1[%c200, %c0_10] : memref<248x128xf32, #tpu.memory_space<vmem>>, vector<1x128xf32>
    %cst_11 = arith.constant 0.000000e+00 : f32
    %16 = vector.broadcast %cst_11 : f32 to vector<8x32xf32>
    %cst_12 = arith.constant 0.000000e+00 : f32
    %17 = vector.broadcast %cst_12 : f32 to vector<8x32xf32>
    %18 = vector.extract_strided_slice %12 {offsets = [0, 0], sizes = [8, 128], strides = [1, 1]} : vector<64x128xf32> to vector<8x128xf32>
    %cst_13 = arith.constant dense<0.000000e+00> : vector<8x128xf32>
    %19 = tpu.matmul %16, %13, %cst_13 {dimension_numbers = #tpu.dot_dimension_numbers<[1], [0], [0], [1], [0, 0, 1, 1], [], []>} : vector<8x32xf32>, vector<32x128xf32>, vector<8x128xf32> -> vector<8x128xf32>
    %20 = arith.addf %18, %19 : vector<8x128xf32>
    %21 = math.tanh %20 : vector<8x128xf32>
    %22 = vector.broadcast %14 : vector<1x128xf32> to vector<8x128xf32>
    %23 = arith.mulf %22, %21 : vector<8x128xf32>
    %24 = vector.broadcast %15 : vector<1x128xf32> to vector<8x128xf32>
    %25 = arith.addf %23, %24 : vector<8x128xf32>
    %26 = vector.extract_strided_slice %25 {offsets = [0, 0], sizes = [8, 32], strides = [1, 1]} : vector<8x128xf32> to vector<8x32xf32>
    %27 = vector.extract_strided_slice %25 {offsets = [0, 32], sizes = [8, 32], strides = [1, 1]} : vector<8x128xf32> to vector<8x32xf32>
    %28 = vector.extract_strided_slice %25 {offsets = [0, 64], sizes = [8, 32], strides = [1, 1]} : vector<8x128xf32> to vector<8x32xf32>
    %29 = vector.extract_strided_slice %25 {offsets = [0, 96], sizes = [8, 32], strides = [1, 1]} : vector<8x128xf32> to vector<8x32xf32>
    %30 = arith.mulf %27, %17 : vector<8x32xf32>
    %31 = arith.mulf %26, %28 : vector<8x32xf32>
    %32 = arith.addf %30, %31 : vector<8x32xf32>
    %33 = math.tanh %32 : vector<8x32xf32>
    %34 = arith.mulf %29, %33 : vector<8x32xf32>
    %35 = vector.extract_strided_slice %12 {offsets = [8, 0], sizes = [8, 128], strides = [1, 1]} : vector<64x128xf32> to vector<8x128xf32>
    %cst_14 = arith.constant dense<0.000000e+00> : vector<8x128xf32>
    %36 = tpu.matmul %34, %13, %cst_14 {dimension_numbers = #tpu.dot_dimension_numbers<[1], [0], [0], [1], [0, 0, 1, 1], [], []>} : vector<8x32xf32>, vector<32x128xf32>, vector<8x128xf32> -> vector<8x128xf32>
    %37 = arith.addf %35, %36 : vector<8x128xf32>
    %38 = math.tanh %37 : vector<8x128xf32>
    %39 = vector.broadcast %14 : vector<1x128xf32> to vector<8x128xf32>
    %40 = arith.mulf %39, %38 : vector<8x128xf32>
    %41 = vector.broadcast %15 : vector<1x128xf32> to vector<8x128xf32>
    %42 = arith.addf %40, %41 : vector<8x128xf32>
    %43 = vector.extract_strided_slice %42 {offsets = [0, 0], sizes = [8, 32], strides = [1, 1]} : vector<8x128xf32> to vector<8x32xf32>
    %44 = vector.extract_strided_slice %42 {offsets = [0, 32], sizes = [8, 32], strides = [1, 1]} : vector<8x128xf32> to vector<8x32xf32>
    %45 = vector.extract_strided_slice %42 {offsets = [0, 64], sizes = [8, 32], strides = [1, 1]} : vector<8x128xf32> to vector<8x32xf32>
    %46 = vector.extract_strided_slice %42 {offsets = [0, 96], sizes = [8, 32], strides = [1, 1]} : vector<8x128xf32> to vector<8x32xf32>
    %47 = arith.mulf %44, %32 : vector<8x32xf32>
    %48 = arith.mulf %43, %45 : vector<8x32xf32>
    %49 = arith.addf %47, %48 : vector<8x32xf32>
    %50 = math.tanh %49 : vector<8x32xf32>
    %51 = arith.mulf %46, %50 : vector<8x32xf32>
    %52 = vector.extract_strided_slice %12 {offsets = [16, 0], sizes = [8, 128], strides = [1, 1]} : vector<64x128xf32> to vector<8x128xf32>
    %cst_15 = arith.constant dense<0.000000e+00> : vector<8x128xf32>
    %53 = tpu.matmul %51, %13, %cst_15 {dimension_numbers = #tpu.dot_dimension_numbers<[1], [0], [0], [1], [0, 0, 1, 1], [], []>} : vector<8x32xf32>, vector<32x128xf32>, vector<8x128xf32> -> vector<8x128xf32>
    %54 = arith.addf %52, %53 : vector<8x128xf32>
    %55 = math.tanh %54 : vector<8x128xf32>
    %56 = vector.broadcast %14 : vector<1x128xf32> to vector<8x128xf32>
    %57 = arith.mulf %56, %55 : vector<8x128xf32>
    %58 = vector.broadcast %15 : vector<1x128xf32> to vector<8x128xf32>
    %59 = arith.addf %57, %58 : vector<8x128xf32>
    %60 = vector.extract_strided_slice %59 {offsets = [0, 0], sizes = [8, 32], strides = [1, 1]} : vector<8x128xf32> to vector<8x32xf32>
    %61 = vector.extract_strided_slice %59 {offsets = [0, 32], sizes = [8, 32], strides = [1, 1]} : vector<8x128xf32> to vector<8x32xf32>
    %62 = vector.extract_strided_slice %59 {offsets = [0, 64], sizes = [8, 32], strides = [1, 1]} : vector<8x128xf32> to vector<8x32xf32>
    %63 = vector.extract_strided_slice %59 {offsets = [0, 96], sizes = [8, 32], strides = [1, 1]} : vector<8x128xf32> to vector<8x32xf32>
    %64 = arith.mulf %61, %49 : vector<8x32xf32>
    %65 = arith.mulf %60, %62 : vector<8x32xf32>
    %66 = arith.addf %64, %65 : vector<8x32xf32>
    %67 = math.tanh %66 : vector<8x32xf32>
    %68 = arith.mulf %63, %67 : vector<8x32xf32>
    %69 = vector.extract_strided_slice %12 {offsets = [24, 0], sizes = [8, 128], strides = [1, 1]} : vector<64x128xf32> to vector<8x128xf32>
    %cst_16 = arith.constant dense<0.000000e+00> : vector<8x128xf32>
    %70 = tpu.matmul %68, %13, %cst_16 {dimension_numbers = #tpu.dot_dimension_numbers<[1], [0], [0], [1], [0, 0, 1, 1], [], []>} : vector<8x32xf32>, vector<32x128xf32>, vector<8x128xf32> -> vector<8x128xf32>
    %71 = arith.addf %69, %70 : vector<8x128xf32>
    %72 = math.tanh %71 : vector<8x128xf32>
    %73 = vector.broadcast %14 : vector<1x128xf32> to vector<8x128xf32>
    %74 = arith.mulf %73, %72 : vector<8x128xf32>
    %75 = vector.broadcast %15 : vector<1x128xf32> to vector<8x128xf32>
    %76 = arith.addf %74, %75 : vector<8x128xf32>
    %77 = vector.extract_strided_slice %76 {offsets = [0, 0], sizes = [8, 32], strides = [1, 1]} : vector<8x128xf32> to vector<8x32xf32>
    %78 = vector.extract_strided_slice %76 {offsets = [0, 32], sizes = [8, 32], strides = [1, 1]} : vector<8x128xf32> to vector<8x32xf32>
    %79 = vector.extract_strided_slice %76 {offsets = [0, 64], sizes = [8, 32], strides = [1, 1]} : vector<8x128xf32> to vector<8x32xf32>
    %80 = vector.extract_strided_slice %76 {offsets = [0, 96], sizes = [8, 32], strides = [1, 1]} : vector<8x128xf32> to vector<8x32xf32>
    %81 = arith.mulf %78, %66 : vector<8x32xf32>
    %82 = arith.mulf %77, %79 : vector<8x32xf32>
    %83 = arith.addf %81, %82 : vector<8x32xf32>
    %84 = math.tanh %83 : vector<8x32xf32>
    %85 = arith.mulf %80, %84 : vector<8x32xf32>
    %86 = vector.extract_strided_slice %12 {offsets = [32, 0], sizes = [8, 128], strides = [1, 1]} : vector<64x128xf32> to vector<8x128xf32>
    %cst_17 = arith.constant dense<0.000000e+00> : vector<8x128xf32>
    %87 = tpu.matmul %85, %13, %cst_17 {dimension_numbers = #tpu.dot_dimension_numbers<[1], [0], [0], [1], [0, 0, 1, 1], [], []>} : vector<8x32xf32>, vector<32x128xf32>, vector<8x128xf32> -> vector<8x128xf32>
    %88 = arith.addf %86, %87 : vector<8x128xf32>
    %89 = math.tanh %88 : vector<8x128xf32>
    %90 = vector.broadcast %14 : vector<1x128xf32> to vector<8x128xf32>
    %91 = arith.mulf %90, %89 : vector<8x128xf32>
    %92 = vector.broadcast %15 : vector<1x128xf32> to vector<8x128xf32>
    %93 = arith.addf %91, %92 : vector<8x128xf32>
    %94 = vector.extract_strided_slice %93 {offsets = [0, 0], sizes = [8, 32], strides = [1, 1]} : vector<8x128xf32> to vector<8x32xf32>
    %95 = vector.extract_strided_slice %93 {offsets = [0, 32], sizes = [8, 32], strides = [1, 1]} : vector<8x128xf32> to vector<8x32xf32>
    %96 = vector.extract_strided_slice %93 {offsets = [0, 64], sizes = [8, 32], strides = [1, 1]} : vector<8x128xf32> to vector<8x32xf32>
    %97 = vector.extract_strided_slice %93 {offsets = [0, 96], sizes = [8, 32], strides = [1, 1]} : vector<8x128xf32> to vector<8x32xf32>
    %98 = arith.mulf %95, %83 : vector<8x32xf32>
    %99 = arith.mulf %94, %96 : vector<8x32xf32>
    %100 = arith.addf %98, %99 : vector<8x32xf32>
    %101 = math.tanh %100 : vector<8x32xf32>
    %102 = arith.mulf %97, %101 : vector<8x32xf32>
    %103 = vector.extract_strided_slice %12 {offsets = [40, 0], sizes = [8, 128], strides = [1, 1]} : vector<64x128xf32> to vector<8x128xf32>
    %cst_18 = arith.constant dense<0.000000e+00> : vector<8x128xf32>
    %104 = tpu.matmul %102, %13, %cst_18 {dimension_numbers = #tpu.dot_dimension_numbers<[1], [0], [0], [1], [0, 0, 1, 1], [], []>} : vector<8x32xf32>, vector<32x128xf32>, vector<8x128xf32> -> vector<8x128xf32>
    %105 = arith.addf %103, %104 : vector<8x128xf32>
    %106 = math.tanh %105 : vector<8x128xf32>
    %107 = vector.broadcast %14 : vector<1x128xf32> to vector<8x128xf32>
    %108 = arith.mulf %107, %106 : vector<8x128xf32>
    %109 = vector.broadcast %15 : vector<1x128xf32> to vector<8x128xf32>
    %110 = arith.addf %108, %109 : vector<8x128xf32>
    %111 = vector.extract_strided_slice %110 {offsets = [0, 0], sizes = [8, 32], strides = [1, 1]} : vector<8x128xf32> to vector<8x32xf32>
    %112 = vector.extract_strided_slice %110 {offsets = [0, 32], sizes = [8, 32], strides = [1, 1]} : vector<8x128xf32> to vector<8x32xf32>
    %113 = vector.extract_strided_slice %110 {offsets = [0, 64], sizes = [8, 32], strides = [1, 1]} : vector<8x128xf32> to vector<8x32xf32>
    %114 = vector.extract_strided_slice %110 {offsets = [0, 96], sizes = [8, 32], strides = [1, 1]} : vector<8x128xf32> to vector<8x32xf32>
    %115 = arith.mulf %112, %100 : vector<8x32xf32>
    %116 = arith.mulf %111, %113 : vector<8x32xf32>
    %117 = arith.addf %115, %116 : vector<8x32xf32>
    %118 = math.tanh %117 : vector<8x32xf32>
    %119 = arith.mulf %114, %118 : vector<8x32xf32>
    %120 = vector.extract_strided_slice %12 {offsets = [48, 0], sizes = [8, 128], strides = [1, 1]} : vector<64x128xf32> to vector<8x128xf32>
    %cst_19 = arith.constant dense<0.000000e+00> : vector<8x128xf32>
    %121 = tpu.matmul %119, %13, %cst_19 {dimension_numbers = #tpu.dot_dimension_numbers<[1], [0], [0], [1], [0, 0, 1, 1], [], []>} : vector<8x32xf32>, vector<32x128xf32>, vector<8x128xf32> -> vector<8x128xf32>
    %122 = arith.addf %120, %121 : vector<8x128xf32>
    %123 = math.tanh %122 : vector<8x128xf32>
    %124 = vector.broadcast %14 : vector<1x128xf32> to vector<8x128xf32>
    %125 = arith.mulf %124, %123 : vector<8x128xf32>
    %126 = vector.broadcast %15 : vector<1x128xf32> to vector<8x128xf32>
    %127 = arith.addf %125, %126 : vector<8x128xf32>
    %128 = vector.extract_strided_slice %127 {offsets = [0, 0], sizes = [8, 32], strides = [1, 1]} : vector<8x128xf32> to vector<8x32xf32>
    %129 = vector.extract_strided_slice %127 {offsets = [0, 32], sizes = [8, 32], strides = [1, 1]} : vector<8x128xf32> to vector<8x32xf32>
    %130 = vector.extract_strided_slice %127 {offsets = [0, 64], sizes = [8, 32], strides = [1, 1]} : vector<8x128xf32> to vector<8x32xf32>
    %131 = vector.extract_strided_slice %127 {offsets = [0, 96], sizes = [8, 32], strides = [1, 1]} : vector<8x128xf32> to vector<8x32xf32>
    %132 = arith.mulf %129, %117 : vector<8x32xf32>
    %133 = arith.mulf %128, %130 : vector<8x32xf32>
    %134 = arith.addf %132, %133 : vector<8x32xf32>
    %135 = math.tanh %134 : vector<8x32xf32>
    %136 = arith.mulf %131, %135 : vector<8x32xf32>
    %137 = vector.extract_strided_slice %12 {offsets = [56, 0], sizes = [8, 128], strides = [1, 1]} : vector<64x128xf32> to vector<8x128xf32>
    %cst_20 = arith.constant dense<0.000000e+00> : vector<8x128xf32>
    %138 = tpu.matmul %136, %13, %cst_20 {dimension_numbers = #tpu.dot_dimension_numbers<[1], [0], [0], [1], [0, 0, 1, 1], [], []>} : vector<8x32xf32>, vector<32x128xf32>, vector<8x128xf32> -> vector<8x128xf32>
    %139 = arith.addf %137, %138 : vector<8x128xf32>
    %140 = math.tanh %139 : vector<8x128xf32>
    %141 = vector.broadcast %14 : vector<1x128xf32> to vector<8x128xf32>
    %142 = arith.mulf %141, %140 : vector<8x128xf32>
    %143 = vector.broadcast %15 : vector<1x128xf32> to vector<8x128xf32>
    %144 = arith.addf %142, %143 : vector<8x128xf32>
    %145 = vector.extract_strided_slice %144 {offsets = [0, 0], sizes = [8, 32], strides = [1, 1]} : vector<8x128xf32> to vector<8x32xf32>
    %146 = vector.extract_strided_slice %144 {offsets = [0, 32], sizes = [8, 32], strides = [1, 1]} : vector<8x128xf32> to vector<8x32xf32>
    %147 = vector.extract_strided_slice %144 {offsets = [0, 64], sizes = [8, 32], strides = [1, 1]} : vector<8x128xf32> to vector<8x32xf32>
    %148 = vector.extract_strided_slice %144 {offsets = [0, 96], sizes = [8, 32], strides = [1, 1]} : vector<8x128xf32> to vector<8x32xf32>
    %149 = arith.mulf %146, %134 : vector<8x32xf32>
    %150 = arith.mulf %145, %147 : vector<8x32xf32>
    %151 = arith.addf %149, %150 : vector<8x32xf32>
    %152 = math.tanh %151 : vector<8x32xf32>
    %153 = arith.mulf %148, %152 : vector<8x32xf32>
    %c208 = arith.constant 208 : index
    %c0_21 = arith.constant 0 : index
    %154 = vector.load %arg1[%c208, %c0_21] : memref<248x128xf32, #tpu.memory_space<vmem>>, vector<32x128xf32>
    %cst_22 = arith.constant dense<0.000000e+00> : vector<8x128xf32>
    %155 = tpu.matmul %153, %154, %cst_22 {dimension_numbers = #tpu.dot_dimension_numbers<[1], [0], [0], [1], [0, 0, 1, 1], [], []>} : vector<8x32xf32>, vector<32x128xf32>, vector<8x128xf32> -> vector<8x128xf32>
    %c240 = arith.constant 240 : index
    %c0_23 = arith.constant 0 : index
    %156 = vector.load %arg1[%c240, %c0_23] : memref<248x128xf32, #tpu.memory_space<vmem>>, vector<1x128xf32>
    %157 = vector.broadcast %156 : vector<1x128xf32> to vector<8x128xf32>
    %158 = arith.addf %155, %157 : vector<8x128xf32>
    %c0_24 = arith.constant 0 : index
    %c0_25 = arith.constant 0 : index
    %159 = vector.load %arg2[%c0_24, %c0_25] : memref<8x128xf32, #tpu.memory_space<vmem>>, vector<8x128xf32>
    tpu.vector_store %arg2[%c0_24, %c0_25], %158 {strides = array<i32>} : memref<8x128xf32, #tpu.memory_space<vmem>>, vector<8x128xf32>,
    return
  }
}

</mosaic_0001>

<llo_original>
// kernel: cnn_lstm_forward.1
$region0: #{cnn_lstm_forward.1}
  #allocation0 [shape = 'u32[]', space=smem, size = 0x4, offset = 0x4, fixed_abs, tag = 'smem constant byte address 0x4 - core index']
  #allocation1 [shape = 'u32[72,128]{1,0:T(1,128)}', space=vmem, size = 0x9000, scoped, tag = 'internal scratch']
  %s0 = inlined_call_operand.vmem [shape: f32[64,16], index: 0, kind: input, shape index: {}]
  %s1 = inlined_call_operand.vmem [shape: f32[248,128], index: 1, kind: input, shape index: {}]
  %s2 = inlined_call_operand.vmem [shape: f32[8,128], index: 2, kind: output, shape index: {}]
  %s3 = sld [smem:[#allocation0]]
  $region18: #{cnn_lstm_forward.1} parent=0
    _
  %s5 = ssub.s32 1, %s3
  %s6 = scalar_select 0, %s5, %s3
  // Predicated region
  $region2: #{cnn_lstm_forward.1} parent=0 // pred_check
    _
  $region3: #{cnn_lstm_forward.1} parent=0 // pred_check_branch
    %8 = sbr.rel (0) target = $region5
  $region4: #{cnn_lstm_forward.1} parent=0 // pred_region
    _
  $region5: #{cnn_lstm_forward.1} parent=0 // pred_fallthru
    _
  // Predicated region
  $region6: #{cnn_lstm_forward.1} parent=0 // pred_check
    _
  $region7: #{cnn_lstm_forward.1} parent=0 // pred_check_branch
    %10 = sbr.rel (0) target = $region9
  $region8: #{cnn_lstm_forward.1} parent=0 // pred_region
    _
  $region9: #{cnn_lstm_forward.1} parent=0 // pred_fallthru
    _
  %v11 = vld [vmem:[%s0] sm:$0xff]
  %v12 = vld [vmem:[%s0 + $0x8] sm:$0xff]
  %v13 = vld [vmem:[%s0 + $0x10] sm:$0xff]
  %v14 = vld [vmem:[%s0 + $0x18] sm:$0xff]
  %v15 = vld [vmem:[%s0 + $0x20] sm:$0xff]
  %v16 = vld [vmem:[%s0 + $0x28] sm:$0xff]
  %v17 = vld [vmem:[%s0 + $0x30] sm:$0xff]
  %v18 = vld [vmem:[%s0 + $0x38] sm:$0xff]
  %v19 = vld [vmem:[%s1] sm:$0xff]
  %v20 = vld [vmem:[%s1 + $0x8] sm:$0xff]
  %v21 = vld [vmem:[%s1 + $0x10] sm:$0x1]
  %v22 = vperm.slane %v21, 0
  %vm23 = vcmask 130048
  %v25 = vsel %vm23, %v11, 0
  %v28 = vsel %vm23, %v12, 0
  %v31 = vsel %vm23, %v13, 0
  %v34 = vsel %vm23, %v14, 0
  %v37 = vsel %vm23, %v15, 0
  %v40 = vsel %vm23, %v16, 0
  %v43 = vsel %vm23, %v17, 0
  %v46 = vsel %vm23, %v18, 0
  %48 = vmatpush.msra.mxu0 0.0
  %49 = vmatpush.msra.mxu0 0.0
  %50 = vmatpush.msra.mxu0 0.0
  %51 = vmatpush.msra.mxu0 0.0
  %52 = vmatpush.msra.mxu0 0.0
  %53 = vmatpush.msra.mxu0 0.0
  %54 = vmatpush.msra.mxu0 0.0
  %55 = vmatpush.msra.mxu0 0.0
  %56 = vmatpush.msra.mxu0 0.0
  %57 = vmatpush.msra.mxu0 0.0
  %58 = vmatpush.msra.mxu0 0.0
  %59 = vmatpush.msra.mxu0 0.0
  %60 = vmatpush.msra.mxu0 0.0
  %61 = vmatpush.msra.mxu0 0.0
  %62 = vmatpush.msra.mxu0 %v20
  %63 = vmatpush.msra.mxu0 %v19
  %64 = vmatmul.f32.gmra.mxu0 %v25
  %v65 = vpop.f32.mrf.mxu0
  %v66 = vadd.f32 %v22, %v65
  %67 = vmatmul.f32.gmra.mxu0 %v28
  %v68 = vpop.f32.mrf.mxu0
  %v69 = vadd.f32 %v22, %v68
  %70 = vmatmul.f32.gmra.mxu0 %v31
  %v71 = vpop.f32.mrf.mxu0
  %v72 = vadd.f32 %v22, %v71
  %73 = vmatmul.f32.gmra.mxu0 %v34
  %v74 = vpop.f32.mrf.mxu0
  %v75 = vadd.f32 %v22, %v74
  %76 = vmatmul.f32.gmra.mxu0 %v37
  %v77 = vpop.f32.mrf.mxu0
  %v78 = vadd.f32 %v22, %v77
  %79 = vmatmul.f32.gmra.mxu0 %v40
  %v80 = vpop.f32.mrf.mxu0
  %v81 = vadd.f32 %v22, %v80
  %82 = vmatmul.f32.gmra.mxu0 %v43
  %v83 = vpop.f32.mrf.mxu0
  %v84 = vadd.f32 %v22, %v83
  %85 = vmatmul.f32.gmra.mxu0 %v46
  %v86 = vpop.f32.mrf.mxu0
  %v87 = vadd.f32 %v22, %v86
  %88 = vdwg.mxu0
  %v89 = vmax.f32 %v66, 0.0
  %v90 = vmax.f32 %v69, 0.0
  %v91 = vmax.f32 %v72, 0.0
  %v92 = vmax.f32 %v75, 0.0
  %v93 = vmax.f32 %v78, 0.0
  %v94 = vmax.f32 %v81, 0.0
  %v95 = vmax.f32 %v84, 0.0
  %v96 = vmax.f32 %v87, 0.0
  %v97 = vld [vmem:[%s1 + $0x18] sm:$0xff]
  %v98 = vld [vmem:[%s1 + $0x20] sm:$0xff]
  %v99 = vld [vmem:[%s1 + $0x28] sm:$0xff]
  %v100 = vld [vmem:[%s1 + $0x30] sm:$0xff]
  %v101 = vld [vmem:[%s1 + $0x38] sm:$0xff]
  %v102 = vld [vmem:[%s1 + $0x40] sm:$0xff]
  %v103 = vld [vmem:[%s1 + $0x48] sm:$0xff]
  %v104 = vld [vmem:[%s1 + $0x50] sm:$0xff]
  %v105 = vld [vmem:[%s1 + $0x58] sm:$0xff]
  %v106 = vld [vmem:[%s1 + $0x60] sm:$0xff]
  %v107 = vld [vmem:[%s1 + $0x68] sm:$0xff]
  %v108 = vld [vmem:[%s1 + $0x70] sm:$0xff]
  %v109 = vld [vmem:[%s1 + $0x78] sm:$0xff]
  %v110 = vld [vmem:[%s1 + $0x80] sm:$0xff]
  %v111 = vld [vmem:[%s1 + $0x88] sm:$0xff]
  %v112 = vld [vmem:[%s1 + $0x90] sm:$0xff]
  %v113 = vld [vmem:[%s1 + $0x98] sm:$0x1]
  %v114 = vperm.slane %v113, 0
  %115 = vmatpush.msra.mxu0 %v112
  %116 = vmatpush.msra.mxu0 %v111
  %117 = vmatpush.msra.mxu0 %v110
  %118 = vmatpush.msra.mxu0 %v109
  %119 = vmatpush.msra.mxu0 %v108
  %120 = vmatpush.msra.mxu0 %v107
  %121 = vmatpush.msra.mxu0 %v106
  %122 = vmatpush.msra.mxu0 %v105
  %123 = vmatpush.msra.mxu0 %v104
  %124 = vmatpush.msra.mxu0 %v103
  %125 = vmatpush.msra.mxu0 %v102
  %126 = vmatpush.msra.mxu0 %v101
  %127 = vmatpush.msra.mxu0 %v100
  %128 = vmatpush.msra.mxu0 %v99
  %129 = vmatpush.msra.mxu0 %v98
  %130 = vmatpush.msra.mxu0 %v97
  %131 = vmatmul.f32.gmra.mxu0 %v89
  %v132 = vpop.f32.mrf.mxu0
  %v133 = vadd.f32 %v114, %v132
  %134 = vmatmul.f32.gmra.mxu0 %v90
  %v135 = vpop.f32.mrf.mxu0
  %v136 = vadd.f32 %v114, %v135
  %137 = vmatmul.f32.gmra.mxu0 %v91
  %v138 = vpop.f32.mrf.mxu0
  %v139 = vadd.f32 %v114, %v138
  %140 = vmatmul.f32.gmra.mxu0 %v92
  %v141 = vpop.f32.mrf.mxu0
  %v142 = vadd.f32 %v114, %v141
  %143 = vmatmul.f32.gmra.mxu0 %v93
  %v144 = vpop.f32.mrf.mxu0
  %v145 = vadd.f32 %v114, %v144
  %146 = vmatmul.f32.gmra.mxu0 %v94
  %v147 = vpop.f32.mrf.mxu0
  %v148 = vadd.f32 %v114, %v147
  %149 = vmatmul.f32.gmra.mxu0 %v95
  %v150 = vpop.f32.mrf.mxu0
  %v151 = vadd.f32 %v114, %v150
  %152 = vmatmul.f32.gmra.mxu0 %v96
  %v153 = vpop.f32.mrf.mxu0
  %v154 = vadd.f32 %v114, %v153
  %155 = vdwg.mxu0
  %v156 = vld [vmem:[%s1 + $0xa0] sm:$0xff]
  %v157 = vld [vmem:[%s1 + $0xa8] sm:$0xff]
  %v158 = vld [vmem:[%s1 + $0xb0] sm:$0xff]
  %v159 = vld [vmem:[%s1 + $0xb8] sm:$0xff]
  %v160 = vld [vmem:[%s1 + $0xc0] sm:$0x1]
  %v161 = vld [vmem:[%s1 + $0xc8] sm:$0x1]
  %vm162 = vcmask 261120
  %v164 = vsel %vm162, 0.0, 0
  %166 = vmatpush.msra.mxu0 0.0
  %167 = vmatpush.msra.mxu0 0.0
  %168 = vmatpush.msra.mxu0 0.0
  %169 = vmatpush.msra.mxu0 0.0
  %170 = vmatpush.msra.mxu0 0.0
  %171 = vmatpush.msra.mxu0 0.0
  %172 = vmatpush.msra.mxu0 0.0
  %173 = vmatpush.msra.mxu0 0.0
  %174 = vmatpush.msra.mxu0 0.0
  %175 = vmatpush.msra.mxu0 0.0
  %176 = vmatpush.msra.mxu0 0.0
  %177 = vmatpush.msra.mxu0 0.0
  %178 = vmatpush.msra.mxu0 %v159
  %179 = vmatpush.msra.mxu0 %v158
  %180 = vmatpush.msra.mxu0 %v157
  %181 = vmatpush.msra.mxu0 %v156
  %182 = vmatmul.f32.gmra.mxu0 %v164
  %v183 = vpop.f32.mrf.mxu0
  %v184 = vadd.f32 0.0, %v183
  %185 = vdwg.mxu0
  %v186 = vadd.f32 %v133, %v184
  %v187 = vtanh.pop %v186
  %v188 = vperm.slane %v160, 0
  %v189 = vmul.f32 %v188, %v187
  %v190 = vperm.slane %v161, 0
  %v191 = vadd.f32 %v189, %v190
  %v192 = vmul.f32 %v191, 0.0
  %194 = vrot.lane.b32.xlu0 %v191, 64
  %v195 = vpop.permute.xlu0 %194
  %v197 = vmul.f32 %v191, %v195
  %199 = vrot.lane.b32.xlu0 %v197, 32
  %v200 = vpop.permute.xlu0 %199
  %v202 = vadd.f32 %v192, %v200
  %v203 = vtanh.pop %v202
  %205 = vrot.lane.b32.xlu0 %v203, 64
  %v206 = vpop.permute.xlu0 %205
  %v208 = vmul.f32 %v191, %v206
  %210 = vrot.lane.b32.xlu0 %v208, 32
  %v211 = vpop.permute.xlu0 %210
  %v212 = vsel %vm162, %v211, 0
  %214 = vmatpush.msra.mxu0 0.0
  %215 = vmatpush.msra.mxu0 0.0
  %216 = vmatpush.msra.mxu0 0.0
  %217 = vmatpush.msra.mxu0 0.0
  %218 = vmatpush.msra.mxu0 0.0
  %219 = vmatpush.msra.mxu0 0.0
  %220 = vmatpush.msra.mxu0 0.0
  %221 = vmatpush.msra.mxu0 0.0
  %222 = vmatpush.msra.mxu0 0.0
  %223 = vmatpush.msra.mxu0 0.0
  %224 = vmatpush.msra.mxu0 0.0
  %225 = vmatpush.msra.mxu0 0.0
  %226 = vmatpush.msra.mxu0 %v159
  %227 = vmatpush.msra.mxu0 %v158
  %228 = vmatpush.msra.mxu0 %v157
  %229 = vmatpush.msra.mxu0 %v156
  %230 = vmatmul.f32.gmra.mxu0 %v212
  %v231 = vpop.f32.mrf.mxu0
  %v232 = vadd.f32 0.0, %v231
  %233 = vdwg.mxu0
  %v234 = vadd.f32 %v136, %v232
  %v235 = vtanh.pop %v234
  %v236 = vmul.f32 %v188, %v235
  %v237 = vadd.f32 %v236, %v190
  %v238 = vmul.f32 %v237, %v202
  %240 = vrot.lane.b32.xlu0 %v237, 64
  %v241 = vpop.permute.xlu0 %240
  %v243 = vmul.f32 %v237, %v241
  %245 = vrot.lane.b32.xlu0 %v243, 32
  %v246 = vpop.permute.xlu0 %245
  %v248 = vadd.f32 %v238, %v246
  %v249 = vtanh.pop %v248
  %251 = vrot.lane.b32.xlu0 %v249, 64
  %v252 = vpop.permute.xlu0 %251
  %v254 = vmul.f32 %v237, %v252
  %256 = vrot.lane.b32.xlu0 %v254, 32
  %v257 = vpop.permute.xlu0 %256
  %v258 = vsel %vm162, %v257, 0
  %260 = vmatpush.msra.mxu0 0.0
  %261 = vmatpush.msra.mxu0 0.0
  %262 = vmatpush.msra.mxu0 0.0
  %263 = vmatpush.msra.mxu0 0.0
  %264 = vmatpush.msra.mxu0 0.0
  %265 = vmatpush.msra.mxu0 0.0
  %266 = vmatpush.msra.mxu0 0.0
  %267 = vmatpush.msra.mxu0 0.0
  %268 = vmatpush.msra.mxu0 0.0
  %269 = vmatpush.msra.mxu0 0.0
  %270 = vmatpush.msra.mxu0 0.0
  %271 = vmatpush.msra.mxu0 0.0
  %272 = vmatpush.msra.mxu0 %v159
  %273 = vmatpush.msra.mxu0 %v158
  %274 = vmatpush.msra.mxu0 %v157
  %275 = vmatpush.msra.mxu0 %v156
  %276 = vmatmul.f32.gmra.mxu0 %v258
  %v277 = vpop.f32.mrf.mxu0
  %v278 = vadd.f32 0.0, %v277
  %279 = vdwg.mxu0
  %v280 = vadd.f32 %v139, %v278
  %v281 = vtanh.pop %v280
  %v282 = vmul.f32 %v188, %v281
  %v283 = vadd.f32 %v282, %v190
  %v284 = vmul.f32 %v283, %v248
  %286 = vrot.lane.b32.xlu0 %v283, 64
  %v287 = vpop.permute.xlu0 %286
  %v289 = vmul.f32 %v283, %v287
  %291 = vrot.lane.b32.xlu0 %v289, 32
  %v292 = vpop.permute.xlu0 %291
  %v294 = vadd.f32 %v284, %v292
  %v295 = vtanh.pop %v294
  %297 = vrot.lane.b32.xlu0 %v295, 64
  %v298 = vpop.permute.xlu0 %297
  %v300 = vmul.f32 %v283, %v298
  %302 = vrot.lane.b32.xlu0 %v300, 32
  %v303 = vpop.permute.xlu0 %302
  %v304 = vsel %vm162, %v303, 0
  %306 = vmatpush.msra.mxu0 0.0
  %307 = vmatpush.msra.mxu0 0.0
  %308 = vmatpush.msra.mxu0 0.0
  %309 = vmatpush.msra.mxu0 0.0
  %310 = vmatpush.msra.mxu0 0.0
  %311 = vmatpush.msra.mxu0 0.0
  %312 = vmatpush.msra.mxu0 0.0
  %313 = vmatpush.msra.mxu0 0.0
  %314 = vmatpush.msra.mxu0 0.0
  %315 = vmatpush.msra.mxu0 0.0
  %316 = vmatpush.msra.mxu0 0.0
  %317 = vmatpush.msra.mxu0 0.0
  %318 = vmatpush.msra.mxu0 %v159
  %319 = vmatpush.msra.mxu0 %v158
  %320 = vmatpush.msra.mxu0 %v157
  %321 = vmatpush.msra.mxu0 %v156
  %322 = vmatmul.f32.gmra.mxu0 %v304
  %v323 = vpop.f32.mrf.mxu0
  %v324 = vadd.f32 0.0, %v323
  %325 = vdwg.mxu0
  %v326 = vadd.f32 %v142, %v324
  %v327 = vtanh.pop %v326
  %v328 = vmul.f32 %v188, %v327
  %v329 = vadd.f32 %v328, %v190
  %v330 = vmul.f32 %v329, %v294
  %332 = vrot.lane.b32.xlu0 %v329, 64
  %v333 = vpop.permute.xlu0 %332
  %v335 = vmul.f32 %v329, %v333
  %337 = vrot.lane.b32.xlu0 %v335, 32
  %v338 = vpop.permute.xlu0 %337
  %v340 = vadd.f32 %v330, %v338
  %v341 = vtanh.pop %v340
  %343 = vrot.lane.b32.xlu0 %v341, 64
  %v344 = vpop.permute.xlu0 %343
  %v346 = vmul.f32 %v329, %v344
  %348 = vrot.lane.b32.xlu0 %v346, 32
  %v349 = vpop.permute.xlu0 %348
  %v350 = vsel %vm162, %v349, 0
  %352 = vmatpush.msra.mxu0 0.0
  %353 = vmatpush.msra.mxu0 0.0
  %354 = vmatpush.msra.mxu0 0.0
  %355 = vmatpush.msra.mxu0 0.0
  %356 = vmatpush.msra.mxu0 0.0
  %357 = vmatpush.msra.mxu0 0.0
  %358 = vmatpush.msra.mxu0 0.0
  %359 = vmatpush.msra.mxu0 0.0
  %360 = vmatpush.msra.mxu0 0.0
  %361 = vmatpush.msra.mxu0 0.0
  %362 = vmatpush.msra.mxu0 0.0
  %363 = vmatpush.msra.mxu0 0.0
  %364 = vmatpush.msra.mxu0 %v159
  %365 = vmatpush.msra.mxu0 %v158
  %366 = vmatpush.msra.mxu0 %v157
  %367 = vmatpush.msra.mxu0 %v156
  %368 = vmatmul.f32.gmra.mxu0 %v350
  %v369 = vpop.f32.mrf.mxu0
  %v370 = vadd.f32 0.0, %v369
  %371 = vdwg.mxu0
  %v372 = vadd.f32 %v145, %v370
  %v373 = vtanh.pop %v372
  %v374 = vmul.f32 %v188, %v373
  %v375 = vadd.f32 %v374, %v190
  %v376 = vmul.f32 %v375, %v340
  %378 = vrot.lane.b32.xlu0 %v375, 64
  %v379 = vpop.permute.xlu0 %378
  %v381 = vmul.f32 %v375, %v379
  %383 = vrot.lane.b32.xlu0 %v381, 32
  %v384 = vpop.permute.xlu0 %383
  %v386 = vadd.f32 %v376, %v384
  %v387 = vtanh.pop %v386
  %389 = vrot.lane.b32.xlu0 %v387, 64
  %v390 = vpop.permute.xlu0 %389
  %v392 = vmul.f32 %v375, %v390
  %394 = vrot.lane.b32.xlu0 %v392, 32
  %v395 = vpop.permute.xlu0 %394
  %v396 = vsel %vm162, %v395, 0
  %398 = vmatpush.msra.mxu0 0.0
  %399 = vmatpush.msra.mxu0 0.0
  %400 = vmatpush.msra.mxu0 0.0
  %401 = vmatpush.msra.mxu0 0.0
  %402 = vmatpush.msra.mxu0 0.0
  %403 = vmatpush.msra.mxu0 0.0
  %404 = vmatpush.msra.mxu0 0.0
  %405 = vmatpush.msra.mxu0 0.0
  %406 = vmatpush.msra.mxu0 0.0
  %407 = vmatpush.msra.mxu0 0.0
  %408 = vmatpush.msra.mxu0 0.0
  %409 = vmatpush.msra.mxu0 0.0
  %410 = vmatpush.msra.mxu0 %v159
  %411 = vmatpush.msra.mxu0 %v158
  %412 = vmatpush.msra.mxu0 %v157
  %413 = vmatpush.msra.mxu0 %v156
  %414 = vmatmul.f32.gmra.mxu0 %v396
  %v415 = vpop.f32.mrf.mxu0
  %v416 = vadd.f32 0.0, %v415
  %417 = vdwg.mxu0
  %v418 = vadd.f32 %v148, %v416
  %v419 = vtanh.pop %v418
  %v420 = vmul.f32 %v188, %v419
  %v421 = vadd.f32 %v420, %v190
  %v422 = vmul.f32 %v421, %v386
  %424 = vrot.lane.b32.xlu0 %v421, 64
  %v425 = vpop.permute.xlu0 %424
  %v427 = vmul.f32 %v421, %v425
  %429 = vrot.lane.b32.xlu0 %v427, 32
  %v430 = vpop.permute.xlu0 %429
  %v432 = vadd.f32 %v422, %v430
  %v433 = vtanh.pop %v432
  %435 = vrot.lane.b32.xlu0 %v433, 64
  %v436 = vpop.permute.xlu0 %435
  %v438 = vmul.f32 %v421, %v436
  %440 = vrot.lane.b32.xlu0 %v438, 32
  %v441 = vpop.permute.xlu0 %440
  %v442 = vsel %vm162, %v441, 0
  %444 = vmatpush.msra.mxu0 0.0
  %445 = vmatpush.msra.mxu0 0.0
  %446 = vmatpush.msra.mxu0 0.0
  %447 = vmatpush.msra.mxu0 0.0
  %448 = vmatpush.msra.mxu0 0.0
  %449 = vmatpush.msra.mxu0 0.0
  %450 = vmatpush.msra.mxu0 0.0
  %451 = vmatpush.msra.mxu0 0.0
  %452 = vmatpush.msra.mxu0 0.0
  %453 = vmatpush.msra.mxu0 0.0
  %454 = vmatpush.msra.mxu0 0.0
  %455 = vmatpush.msra.mxu0 0.0
  %456 = vmatpush.msra.mxu0 %v159
  %457 = vmatpush.msra.mxu0 %v158
  %458 = vmatpush.msra.mxu0 %v157
  %459 = vmatpush.msra.mxu0 %v156
  %460 = vmatmul.f32.gmra.mxu0 %v442
  %v461 = vpop.f32.mrf.mxu0
  %v462 = vadd.f32 0.0, %v461
  %463 = vdwg.mxu0
  %v464 = vadd.f32 %v151, %v462
  %v465 = vtanh.pop %v464
  %v466 = vmul.f32 %v188, %v465
  %v467 = vadd.f32 %v466, %v190
  %v468 = vmul.f32 %v467, %v432
  %470 = vrot.lane.b32.xlu0 %v467, 64
  %v471 = vpop.permute.xlu0 %470
  %v473 = vmul.f32 %v467, %v471
  %475 = vrot.lane.b32.xlu0 %v473, 32
  %v476 = vpop.permute.xlu0 %475
  %v478 = vadd.f32 %v468, %v476
  %v479 = vtanh.pop %v478
  %481 = vrot.lane.b32.xlu0 %v479, 64
  %v482 = vpop.permute.xlu0 %481
  %v484 = vmul.f32 %v467, %v482
  %486 = vrot.lane.b32.xlu0 %v484, 32
  %v487 = vpop.permute.xlu0 %486
  %v488 = vsel %vm162, %v487, 0
  %490 = vmatpush.msra.mxu0 0.0
  %491 = vmatpush.msra.mxu0 0.0
  %492 = vmatpush.msra.mxu0 0.0
  %493 = vmatpush.msra.mxu0 0.0
  %494 = vmatpush.msra.mxu0 0.0
  %495 = vmatpush.msra.mxu0 0.0
  %496 = vmatpush.msra.mxu0 0.0
  %497 = vmatpush.msra.mxu0 0.0
  %498 = vmatpush.msra.mxu0 0.0
  %499 = vmatpush.msra.mxu0 0.0
  %500 = vmatpush.msra.mxu0 0.0
  %501 = vmatpush.msra.mxu0 0.0
  %502 = vmatpush.msra.mxu0 %v159
  %503 = vmatpush.msra.mxu0 %v158
  %504 = vmatpush.msra.mxu0 %v157
  %505 = vmatpush.msra.mxu0 %v156
  %506 = vmatmul.f32.gmra.mxu0 %v488
  %v507 = vpop.f32.mrf.mxu0
  %v508 = vadd.f32 0.0, %v507
  %509 = vdwg.mxu0
  %v510 = vadd.f32 %v154, %v508
  %v511 = vtanh.pop %v510
  %v512 = vmul.f32 %v188, %v511
  %v513 = vadd.f32 %v512, %v190
  %v514 = vmul.f32 %v513, %v478
  %516 = vrot.lane.b32.xlu0 %v513, 64
  %v517 = vpop.permute.xlu0 %516
  %v519 = vmul.f32 %v513, %v517
  %521 = vrot.lane.b32.xlu0 %v519, 32
  %v522 = vpop.permute.xlu0 %521
  %v524 = vadd.f32 %v514, %v522
  %v525 = vtanh.pop %v524
  %527 = vrot.lane.b32.xlu0 %v525, 64
  %v528 = vpop.permute.xlu0 %527
  %v530 = vmul.f32 %v513, %v528
  %v531 = vld [vmem:[%s1 + $0xd0] sm:$0xff]
  %v532 = vld [vmem:[%s1 + $0xd8] sm:$0xff]
  %v533 = vld [vmem:[%s1 + $0xe0] sm:$0xff]
  %v534 = vld [vmem:[%s1 + $0xe8] sm:$0xff]
  %v535 = vld [vmem:[%s1 + $0xf0] sm:$0x1]
  %v536 = vperm.slane %v535, 0
  %538 = vrot.lane.b32.xlu0 %v530, 32
  %v539 = vpop.permute.xlu0 %538
  %v540 = vsel %vm162, %v539, 0
  %542 = vmatpush.msra.mxu0 0.0
  %543 = vmatpush.msra.mxu0 0.0
  %544 = vmatpush.msra.mxu0 0.0
  %545 = vmatpush.msra.mxu0 0.0
  %546 = vmatpush.msra.mxu0 0.0
  %547 = vmatpush.msra.mxu0 0.0
  %548 = vmatpush.msra.mxu0 0.0
  %549 = vmatpush.msra.mxu0 0.0
  %550 = vmatpush.msra.mxu0 0.0
  %551 = vmatpush.msra.mxu0 0.0
  %552 = vmatpush.msra.mxu0 0.0
  %553 = vmatpush.msra.mxu0 0.0
  %554 = vmatpush.msra.mxu0 %v534
  %555 = vmatpush.msra.mxu0 %v533
  %556 = vmatpush.msra.mxu0 %v532
  %557 = vmatpush.msra.mxu0 %v531
  %558 = vmatmul.f32.gmra.mxu0 %v540
  %v559 = vpop.f32.mrf.mxu0
  %v560 = vadd.f32 %v536, %v559
  %561 = vdwg.mxu0
  %562 = vst [vmem:[%s2] sm:$0xff] %v560
  // Predicated region
  $region10: #{cnn_lstm_forward.1} parent=0 // pred_check
    _
  $region11: #{cnn_lstm_forward.1} parent=0 // pred_check_branch
    %564 = sbr.rel (0) target = $region13
  $region12: #{cnn_lstm_forward.1} parent=0 // pred_region
    _
  $region13: #{cnn_lstm_forward.1} parent=0 // pred_fallthru
    _
  // Predicated region
  $region14: #{cnn_lstm_forward.1} parent=0 // pred_check
    _
  $region15: #{cnn_lstm_forward.1} parent=0 // pred_check_branch
    %566 = sbr.rel (0) target = $region17
  $region16: #{cnn_lstm_forward.1} parent=0 // pred_region
    _
  $region17: #{cnn_lstm_forward.1} parent=0 // pred_fallthru
    _

</llo_original>
